<compile_context>
chip_gen: v6e
topology: v6e:2x2x1
jax: 0.10.0
libtpu: 0.0.40
codegen_flags: <defaults>
</compile_context>

<pallas_src>
import math
import numpy as np
import jax
import jax.numpy as jnp
from jax.experimental import pallas as pl
from jax.experimental.pallas import tpu as pltpu

# ----- constants implied by the PyTorch module -----
ORIG_FREQ = 44100
NEW_FREQ = 32000
SAMPLE_RATE = 32000
N_FFT = 4096
WIN_LENGTH = 3072
HOP_LENGTH = 500
N_MELS = 256
LOWPASS_FILTER_WIDTH = 6   # torchaudio Resample defaults
ROLLOFF = 0.99
N_FREQS = N_FFT // 2 + 1   # 2049 (onesided)
WIN_OFFSET = (N_FFT - WIN_LENGTH) // 2   # 512: centered-window zero-pad offset


def _round_up(x, m):
    return -(-x // m) * m


def _choose_row_tile(rows, max_tile, align):
    # tile size is a multiple of `align` (8 for f32 rows, 16 for bf16 rows) and <= max_tile
    r = max(align, _round_up(rows, align))
    tm = min(max_tile, r)
    return tm, _round_up(r, tm)


# ---------------- deterministic parameter construction (host, float64 -> float32) ----------------
def make_resample_kernel():
    # torchaudio.functional._get_sinc_resample_kernel, sinc_interp_hann
    g = math.gcd(ORIG_FREQ, NEW_FREQ)
    orig, new = ORIG_FREQ // g, NEW_FREQ // g                     # 441, 320
    base_freq = min(orig, new) * ROLLOFF
    width = int(math.ceil(LOWPASS_FILTER_WIDTH * orig / base_freq))
    idx = np.arange(-width, width + orig, dtype=np.float64) / orig
    t = np.arange(0, -new, -1, dtype=np.float64)[:, None] / new + idx[None, :]
    t *= base_freq
    t = np.clip(t, -LOWPASS_FILTER_WIDTH, LOWPASS_FILTER_WIDTH)
    window = np.cos(t * np.pi / LOWPASS_FILTER_WIDTH / 2.0) ** 2
    t = t * np.pi
    scale = base_freq / orig
    safe_t = np.where(t == 0.0, 1.0, t)
    kern = np.where(t == 0.0, 1.0, np.sin(safe_t) / safe_t) * window * scale
    return kern.astype(np.float32), width, orig, new              # (320, 2*width+441)


def make_hann_window():
    # torch.hann_window(3072, periodic=True); NOT zero-padded here — the DFT matrices
    # only cover the 3072 samples where the centered window is nonzero.
    n = np.arange(WIN_LENGTH, dtype=np.float64)
    return 0.5 - 0.5 * np.cos(2.0 * np.pi * n / WIN_LENGTH)       # (3072,)


def make_dft_matrices(f_pad, win):
    # onesided real DFT restricted to sample indices n in [512, 3584) of the 4096-pt frame
    # (window is zero elsewhere), with the Hann window folded in. Exact angles via int mod.
    # NOTE: imag part uses +sin (not -sin); harmless since only |.|^2 is consumed.
    n = np.arange(WIN_OFFSET, WIN_OFFSET + WIN_LENGTH, dtype=np.int64)
    f = np.arange(N_FREQS, dtype=np.int64)
    k = (n[:, None] * f[None, :]) % N_FFT
    ang = 2.0 * np.pi * k.astype(np.float64) / N_FFT
    cos_m = (win[:, None] * np.cos(ang)).astype(np.float32)       # (3072, 2049)
    sin_m = (win[:, None] * np.sin(ang)).astype(np.float32)
    pad = ((0, 0), (0, f_pad - N_FREQS))
    return np.pad(cos_m, pad), np.pad(sin_m, pad)                 # (3072, f_pad) each


def make_mel_fbanks(f_pad):
    # torchaudio.functional.melscale_fbanks(norm=None, mel_scale='htk'), f_min=0, f_max=sr//2
    f_min, f_max = 0.0, float(SAMPLE_RATE // 2)
    all_freqs = np.linspace(0.0, SAMPLE_RATE // 2, N_FREQS)
    m_min = 2595.0 * np.log10(1.0 + f_min / 700.0)
    m_max = 2595.0 * np.log10(1.0 + f_max / 700.0)
    m_pts = np.linspace(m_min, m_max, N_MELS + 2)
    f_pts = 700.0 * (10.0 ** (m_pts / 2595.0) - 1.0)
    f_diff = f_pts[1:] - f_pts[:-1]
    slopes = f_pts[None, :] - all_freqs[:, None]
    down = (-slopes[:, :-2]) / f_diff[:-1]
    up = slopes[:, 2:] / f_diff[1:]
    fb = np.maximum(0.0, np.minimum(down, up)).astype(np.float32)  # (2049, 256)
    return np.pad(fb, ((0, f_pad - N_FREQS), (0, 0)))              # zero rows for padded bins


# ---------------- Pallas kernels ----------------
def _matmul_kernel(a_ref, b_ref, o_ref):
    # resample: frames @ sinc_kernel^T on the MXU (kept f32 to preserve waveform accuracy)
    o_ref[...] = jnp.dot(a_ref[...], b_ref[...], preferred_element_type=jnp.float32)


def _melspec_kernel(frames_ref, cos_ref, sin_ref, fb_ref, out_ref, acc_ref):
    # grid = (row_tiles, freq_tiles); freq axis is the reduction -> accumulate into acc_ref
    j = pl.program_id(1)

    @pl.when(j == 0)
    def _():
        acc_ref[...] = jnp.zeros_like(acc_ref)

    f = frames_ref[...]                                                   # bf16, Hann pre-folded
    re = jnp.dot(f, cos_ref[...], preferred_element_type=jnp.float32)     # real DFT part (MXU, bf16)
    im = jnp.dot(f, sin_ref[...], preferred_element_type=jnp.float32)     # imag DFT part (sign moot)
    power = (re * re + im * im).astype(jnp.bfloat16)                      # power spectrum (VPU)
    acc_ref[...] += jnp.dot(power, fb_ref[...], preferred_element_type=jnp.float32)  # mel (MXU)

    @pl.when(j == pl.num_programs(1) - 1)
    def _():
        out_ref[...] = jnp.log(acc_ref[...] + 1e-5)


# ---------------- wrappers ----------------
def resample(x, kern, width, orig, new, max_row_tile=256):
    B, L = x.shape
    klen = kern.shape[1]
    x_pad = jnp.pad(x, ((0, 0), (width, width + orig)))
    num_frames = L // orig + 1
    idx = np.arange(num_frames)[:, None] * orig + np.arange(klen)[None, :]
    frames = x_pad[:, idx].reshape(B * num_frames, klen)              # strided framing (glue)

    rows = B * num_frames
    tm, rows_p = _choose_row_tile(rows, max_row_tile, align=8)
    klen_p = _round_up(klen, 128)
    new_p = _round_up(new, 128)                                       # 320 -> 384: lane-dense stores
    frames_p = jnp.pad(frames, ((0, rows_p - rows), (0, klen_p - klen)))
    w_t = jnp.pad(jnp.asarray(kern.T), ((0, klen_p - klen), (0, new_p - new)))

    out = pl.pallas_call(
        _matmul_kernel,
        out_shape=jax.ShapeDtypeStruct((rows_p, new_p), jnp.float32),
        grid=(rows_p // tm,),
        in_specs=[pl.BlockSpec((tm, klen_p), lambda i: (i, 0)),
                  pl.BlockSpec((klen_p, new_p), lambda i: (0, 0))],
        out_specs=pl.BlockSpec((tm, new_p), lambda i: (i, 0)),
        compiler_params=pltpu.CompilerParams(
            dimension_semantics=("parallel",)),
    )(frames_p, w_t)

    out = out[:rows, :new].reshape(B, num_frames * new)
    target = (new * L + orig - 1) // orig                             # ceil(new*L/orig)
    return out[:, :target]


def mel_spectrogram(y, cos_m, sin_m, fb, tf=256, max_row_tile=256):
    B, L = y.shape
    pad = N_FFT // 2
    if L <= pad:
        raise ValueError(f"resampled signal length {L} must exceed n_fft//2={pad} for reflect pad")
    y_pad = jnp.pad(y, ((0, 0), (pad, pad)), mode="reflect")          # center=True, reflect
    n_frames = 1 + (L + 2 * pad - N_FFT) // HOP_LENGTH
    # only the 3072 samples under the (centered) Hann window are needed per frame
    idx = (np.arange(n_frames)[:, None] * HOP_LENGTH + WIN_OFFSET
           + np.arange(WIN_LENGTH)[None, :])
    frames = y_pad[:, idx].reshape(B * n_frames, WIN_LENGTH)          # STFT framing (glue)
    # TODO(synk): replace this overlapping-frame gather (~6x HBM expansion) with in-kernel
    # DMA framing straight from y_pad (memory_space=pl.ANY + manual async copies).

    rows = B * n_frames
    tm, rows_p = _choose_row_tile(rows, max_row_tile, align=16)       # 16: bf16 sublane packing
    frames_p = jnp.pad(frames, ((0, rows_p - rows), (0, 0))).astype(jnp.bfloat16)

    f_pad = cos_m.shape[1]
    n_f_tiles = f_pad // tf

    out = pl.pallas_call(
        _melspec_kernel,
        out_shape=jax.ShapeDtypeStruct((rows_p, N_MELS), jnp.float32),
        grid=(rows_p // tm, n_f_tiles),
        in_specs=[
            pl.BlockSpec((tm, WIN_LENGTH), lambda i, j: (i, 0)),
            pl.BlockSpec((WIN_LENGTH, tf), lambda i, j: (0, j)),
            pl.BlockSpec((WIN_LENGTH, tf), lambda i, j: (0, j)),
            pl.BlockSpec((tf, N_MELS), lambda i, j: (j, 0)),
        ],
        out_specs=pl.BlockSpec((tm, N_MELS), lambda i, j: (i, 0)),
        scratch_shapes=[pltpu.VMEM((tm, N_MELS), jnp.float32)],
        compiler_params=pltpu.CompilerParams(
            dimension_semantics=("parallel", "arbitrary"),
            vmem_limit_bytes=48 * 1024 * 1024),                       # <= v7x physical 64 MiB
    )(frames_p, cos_m, sin_m, fb)

    mel = out[:rows].reshape(B, n_frames, N_MELS)
    return jnp.transpose(mel, (0, 2, 1))                              # (B, n_mels, time)


def mel_spec_forward(x):
    kern, width, orig, new = make_resample_kernel()
    f_pad = _round_up(N_FREQS, 256)                                   # 2304 -> 9 freq tiles of 256
    win = make_hann_window()
    cos_np, sin_np = make_dft_matrices(f_pad, win)                    # window folded in
    cos_m = jnp.asarray(cos_np).astype(jnp.bfloat16)
    sin_m = jnp.asarray(sin_np).astype(jnp.bfloat16)
    fb = jnp.asarray(make_mel_fbanks(f_pad)).astype(jnp.bfloat16)

    y = resample(x, kern, width, orig, new)                           # (B, ceil(L*320/441))
    return mel_spectrogram(y, cos_m, sin_m, fb)                       # log-mel already applied


if __name__ == "__main__":
    key = jax.random.PRNGKey(0)
    B, L = 2, 4410  # 0.1 s of 44.1 kHz audio -> 3200 samples @ 32 kHz -> 7 STFT frames
    x = jax.random.uniform(key, (B, L), dtype=jnp.float32, minval=-1.0, maxval=1.0)

    out = mel_spec_forward(x)
    out = jax.block_until_ready(out)
    assert out.shape == (B, N_MELS, 7) and out.dtype == jnp.float32
    assert bool(jnp.all(jnp.isfinite(out)))
    print("KERNEL_OK")
</pallas_src>

<mosaic_0001>
module attributes {stable_mosaic.version = 11 : i64} {
  func.func @_matmul_kernel(%arg0: i32, %arg1: memref<24x512xf32, #tpu.memory_space<vmem>>, %arg2: memref<512x384xf32, #tpu.memory_space<vmem>>, %arg3: memref<24x384xf32, #tpu.memory_space<vmem>>) attributes {dimension_semantics = [#tpu.dimension_semantics<parallel>], iteration_bounds = array<i64: 1>, scalar_prefetch = 0 : i64, scratch_operands = 0 : i64, tpu.core_type = #tpu.core_type<tc>, window_params = [{transform_indices = @transform_0, window_bounds = array<i64: 24, 512>}, {pipeline_mode = #tpu.pipeline_mode<synchronous>, transform_indices = @transform_1, window_bounds = array<i64: 512, 384>}, {transform_indices = @transform_2, window_bounds = array<i64: 24, 384>}]} {
    %c0 = arith.constant 0 : index
    %c0_0 = arith.constant 0 : index
    %0 = vector.load %arg1[%c0, %c0_0] : memref<24x512xf32, #tpu.memory_space<vmem>>, vector<24x512xf32>
    %c0_1 = arith.constant 0 : index
    %c0_2 = arith.constant 0 : index
    %1 = vector.load %arg2[%c0_1, %c0_2] : memref<512x384xf32, #tpu.memory_space<vmem>>, vector<512x384xf32>
    %cst = arith.constant dense<0.000000e+00> : vector<24x384xf32>
    %2 = tpu.matmul %0, %1, %cst {dimension_numbers = #tpu.dot_dimension_numbers<[1], [0], [0], [1], [0, 0, 1, 1], [], []>} : vector<24x512xf32>, vector<512x384xf32>, vector<24x384xf32> -> vector<24x384xf32>
    %c0_3 = arith.constant 0 : index
    %c0_4 = arith.constant 0 : index
    %3 = vector.load %arg3[%c0_3, %c0_4] : memref<24x384xf32, #tpu.memory_space<vmem>>, vector<24x384xf32>
    tpu.vector_store %arg3[%c0_3, %c0_4], %2 {strides = array<i32>} : memref<24x384xf32, #tpu.memory_space<vmem>>, vector<24x384xf32>,
    return
  }
  func.func @transform_0(%arg0: i32) -> (i32, i32) {
    %c0_i32 = arith.constant 0 : i32
    %c0_i32_0 = arith.constant 0 : i32
    return %arg0, %c0_i32 : i32, i32
  }
  func.func @transform_1(%arg0: i32) -> (i32, i32) {
    %c0_i32 = arith.constant 0 : i32
    %c0_i32_0 = arith.constant 0 : i32
    %c0_i32_1 = arith.constant 0 : i32
    return %c0_i32, %c0_i32_0 : i32, i32
  }
  func.func @transform_2(%arg0: i32) -> (i32, i32) {
    %c0_i32 = arith.constant 0 : i32
    %c0_i32_0 = arith.constant 0 : i32
    return %arg0, %c0_i32 : i32, i32
  }
}

</mosaic_0001>

<llo_original>
// kernel: tpu_custom_call.1
$region0: #{tpu_custom_call.1}
  #allocation0 [shape = 'u32[]', space=smem, size = 0x4, offset = 0x4, fixed_abs, tag = 'smem constant byte address 0x4 - core index']
  #allocation1 [shape = 'u32[144,128]{1,0:T(1,128)}', space=vmem, size = 0x12000, scoped, tag = 'internal scratch']
  %s0 = inlined_call_operand.hbm [shape: f32[24,512], index: 0, kind: input, shape index: {}]
  %s1 = inlined_call_operand.hbm [shape: f32[512,384], index: 1, kind: input, shape index: {}]
  %s2 = inlined_call_operand.hbm [shape: f32[24,384], index: 2, kind: output, shape index: {}]
  %s3 = sld [smem:[#allocation0]]
  $region26: #{tpu_custom_call.1} parent=0
    _
  %s5 = ssub.s32 1, %s3
  %s6 = scalar_select 0, %s5, %s3
  $region1: #{tpu_custom_call.1} parent=0
    #allocation2 [shape = 'u8[49152]{0}', space=vmem, size = 0xc000, scoped, tag = 'input window, operand 0, single buffered']
    #allocation3 [shape = 's32[1]{0}', space=sflag, size = 0x4, scoped, tag = 'scoped memory for tpu_custom_call.1']
    #allocation4 [shape = 's32[1]{0}', space=sflag, size = 0x4, scoped, tag = 'scoped memory for tpu_custom_call.1']
    #allocation5 [shape = 'u8[786432]{0}', space=vmem, size = 0xc0000, scoped, tag = 'input window, operand 1, single buffered']
    #allocation6 [shape = 's32[1]{0}', space=sflag, size = 0x4, scoped, tag = 'scoped memory for tpu_custom_call.1']
    #allocation7 [shape = 'u8[36864]{0}', space=vmem, size = 0x9000, scoped, tag = 'output window, operand 0, single buffered']
    %7 = vsyncpa [#allocation3], 0
    %8 = vsyncpa [#allocation6], 0
    %9 = vsyncpa [#allocation4], 0
    // Predicated region
    $region2: #{tpu_custom_call.1} parent=1 // pred_check
      _
    $region3: #{tpu_custom_call.1} parent=1 // pred_check_branch
      %11 = sbr.rel (0) target = $region5
    $region4: #{tpu_custom_call.1} parent=1 // pred_region
      %s13 = ssub.s32 1536, 1536
      %14 = vsyncadd [#allocation3], %s13
      %s15 = sshll.u32 [#allocation2], 4
      %s16 = int_to_ptr.vmem [resolvable:$true] %s15
      %21 = dma.hbm_to_vmem [thread:$0]  %s0, 1536, %s16, [#allocation3], 512, 512, 32
    $region5: #{tpu_custom_call.1} parent=1 // pred_fallthru
      _
    // Predicated region
    $region6: #{tpu_custom_call.1} parent=1 // pred_check
      _
    $region7: #{tpu_custom_call.1} parent=1 // pred_check_branch
      %23 = sbr.rel (0) target = $region9
    $region8: #{tpu_custom_call.1} parent=1 // pred_region
      %s25 = ssub.s32 24576, 24576
      %26 = vsyncadd [#allocation6], %s25
      %s27 = sshll.u32 [#allocation5], 4
      %s28 = int_to_ptr.vmem [resolvable:$true] %s27
      %33 = dma.hbm_to_vmem [thread:$0]  %s1, 24576, %s28, [#allocation6], 384, 384, 24
    $region9: #{tpu_custom_call.1} parent=1 // pred_fallthru
      _
    // Predicated region
    $region10: #{tpu_custom_call.1} parent=1 // pred_check
      _
    $region11: #{tpu_custom_call.1} parent=1 // pred_check_branch
      %35 = sbr.rel (0) target = $region13
    $region12: #{tpu_custom_call.1} parent=1 // pred_region
      %36 = dma.done [#allocation3], 1536
    $region13: #{tpu_custom_call.1} parent=1 // pred_fallthru
      _
    // Predicated region
    $region14: #{tpu_custom_call.1} parent=1 // pred_check
      _
    $region15: #{tpu_custom_call.1} parent=1 // pred_check_branch
      %38 = sbr.rel (0) target = $region17
    $region16: #{tpu_custom_call.1} parent=1 // pred_region
      %39 = dma.done [#allocation6], 24576
    $region17: #{tpu_custom_call.1} parent=1 // pred_fallthru
      _
    %v40 = vld [vmem:[#allocation2] sm:$0xff]
    %v41 = vld [vmem:[#allocation2 + $0x8] sm:$0xff]
    %v42 = vld [vmem:[#allocation2 + $0x10] sm:$0xff]
    %v43 = vld [vmem:[#allocation2 + $0x18] sm:$0xff]
    %v44 = vld [vmem:[#allocation2 + $0x20] sm:$0xff]
    %v45 = vld [vmem:[#allocation2 + $0x28] sm:$0xff]
    %v46 = vld [vmem:[#allocation2 + $0x30] sm:$0xff]
    %v47 = vld [vmem:[#allocation2 + $0x38] sm:$0xff]
    %v48 = vld [vmem:[#allocation2 + $0x40] sm:$0xff]
    %v49 = vld [vmem:[#allocation2 + $0x48] sm:$0xff]
    %v50 = vld [vmem:[#allocation2 + $0x50] sm:$0xff]
    %v51 = vld [vmem:[#allocation2 + $0x58] sm:$0xff]
    %v52 = vld [vmem:[#allocation5] sm:$0xff]
    %v53 = vld [vmem:[#allocation5 + $0x8] sm:$0xff]
    %v54 = vld [vmem:[#allocation5 + $0x10] sm:$0xff]
    %v55 = vld [vmem:[#allocation5 + $0x18] sm:$0xff]
    %v56 = vld [vmem:[#allocation5 + $0x20] sm:$0xff]
    %v57 = vld [vmem:[#allocation5 + $0x28] sm:$0xff]
    %v58 = vld [vmem:[#allocation5 + $0x30] sm:$0xff]
    %v59 = vld [vmem:[#allocation5 + $0x38] sm:$0xff]
    %v60 = vld [vmem:[#allocation5 + $0x40] sm:$0xff]
    %v61 = vld [vmem:[#allocation5 + $0x48] sm:$0xff]
    %v62 = vld [vmem:[#allocation5 + $0x50] sm:$0xff]
    %v63 = vld [vmem:[#allocation5 + $0x58] sm:$0xff]
    %v64 = vld [vmem:[#allocation5 + $0x60] sm:$0xff]
    %v65 = vld [vmem:[#allocation5 + $0x68] sm:$0xff]
    %v66 = vld [vmem:[#allocation5 + $0x70] sm:$0xff]
    %v67 = vld [vmem:[#allocation5 + $0x78] sm:$0xff]
    %v68 = vld [vmem:[#allocation5 + $0x80] sm:$0xff]
    %v69 = vld [vmem:[#allocation5 + $0x88] sm:$0xff]
    %v70 = vld [vmem:[#allocation5 + $0x90] sm:$0xff]
    %v71 = vld [vmem:[#allocation5 + $0x98] sm:$0xff]
    %v72 = vld [vmem:[#allocation5 + $0xa0] sm:$0xff]
    %v73 = vld [vmem:[#allocation5 + $0xa8] sm:$0xff]
    %v74 = vld [vmem:[#allocation5 + $0xb0] sm:$0xff]
    %v75 = vld [vmem:[#allocation5 + $0xb8] sm:$0xff]
    %v76 = vld [vmem:[#allocation5 + $0xc0] sm:$0xff]
    %v77 = vld [vmem:[#allocation5 + $0xc8] sm:$0xff]
    %v78 = vld [vmem:[#allocation5 + $0xd0] sm:$0xff]
    %v79 = vld [vmem:[#allocation5 + $0xd8] sm:$0xff]
    %v80 = vld [vmem:[#allocation5 + $0xe0] sm:$0xff]
    %v81 = vld [vmem:[#allocation5 + $0xe8] sm:$0xff]
    %v82 = vld [vmem:[#allocation5 + $0xf0] sm:$0xff]
    %v83 = vld [vmem:[#allocation5 + $0xf8] sm:$0xff]
    %v84 = vld [vmem:[#allocation5 + $0x100] sm:$0xff]
    %v85 = vld [vmem:[#allocation5 + $0x108] sm:$0xff]
    %v86 = vld [vmem:[#allocation5 + $0x110] sm:$0xff]
    %v87 = vld [vmem:[#allocation5 + $0x118] sm:$0xff]
    %v88 = vld [vmem:[#allocation5 + $0x120] sm:$0xff]
    %v89 = vld [vmem:[#allocation5 + $0x128] sm:$0xff]
    %v90 = vld [vmem:[#allocation5 + $0x130] sm:$0xff]
    %v91 = vld [vmem:[#allocation5 + $0x138] sm:$0xff]
    %v92 = vld [vmem:[#allocation5 + $0x140] sm:$0xff]
    %v93 = vld [vmem:[#allocation5 + $0x148] sm:$0xff]
    %v94 = vld [vmem:[#allocation5 + $0x150] sm:$0xff]
    %v95 = vld [vmem:[#allocation5 + $0x158] sm:$0xff]
    %v96 = vld [vmem:[#allocation5 + $0x160] sm:$0xff]
    %v97 = vld [vmem:[#allocation5 + $0x168] sm:$0xff]
    %v98 = vld [vmem:[#allocation5 + $0x170] sm:$0xff]
    %v99 = vld [vmem:[#allocation5 + $0x178] sm:$0xff]
    %v100 = vld [vmem:[#allocation5 + $0x180] sm:$0xff]
    %v101 = vld [vmem:[#allocation5 + $0x188] sm:$0xff]
    %v102 = vld [vmem:[#allocation5 + $0x190] sm:$0xff]
    %v103 = vld [vmem:[#allocation5 + $0x198] sm:$0xff]
    %v104 = vld [vmem:[#allocation5 + $0x1a0] sm:$0xff]
    %v105 = vld [vmem:[#allocation5 + $0x1a8] sm:$0xff]
    %v106 = vld [vmem:[#allocation5 + $0x1b0] sm:$0xff]
    %v107 = vld [vmem:[#allocation5 + $0x1b8] sm:$0xff]
    %v108 = vld [vmem:[#allocation5 + $0x1c0] sm:$0xff]
    %v109 = vld [vmem:[#allocation5 + $0x1c8] sm:$0xff]
    %v110 = vld [vmem:[#allocation5 + $0x1d0] sm:$0xff]
    %v111 = vld [vmem:[#allocation5 + $0x1d8] sm:$0xff]
    %v112 = vld [vmem:[#allocation5 + $0x1e0] sm:$0xff]
    %v113 = vld [vmem:[#allocation5 + $0x1e8] sm:$0xff]
    %v114 = vld [vmem:[#allocation5 + $0x1f0] sm:$0xff]
    %v115 = vld [vmem:[#allocation5 + $0x1f8] sm:$0xff]
    %v116 = vld [vmem:[#allocation5 + $0x200] sm:$0xff]
    %v117 = vld [vmem:[#allocation5 + $0x208] sm:$0xff]
    %v118 = vld [vmem:[#allocation5 + $0x210] sm:$0xff]
    %v119 = vld [vmem:[#allocation5 + $0x218] sm:$0xff]
    %v120 = vld [vmem:[#allocation5 + $0x220] sm:$0xff]
    %v121 = vld [vmem:[#allocation5 + $0x228] sm:$0xff]
    %v122 = vld [vmem:[#allocation5 + $0x230] sm:$0xff]
    %v123 = vld [vmem:[#allocation5 + $0x238] sm:$0xff]
    %v124 = vld [vmem:[#allocation5 + $0x240] sm:$0xff]
    %v125 = vld [vmem:[#allocation5 + $0x248] sm:$0xff]
    %v126 = vld [vmem:[#allocation5 + $0x250] sm:$0xff]
    %v127 = vld [vmem:[#allocation5 + $0x258] sm:$0xff]
    %v128 = vld [vmem:[#allocation5 + $0x260] sm:$0xff]
    %v129 = vld [vmem:[#allocation5 + $0x268] sm:$0xff]
    %v130 = vld [vmem:[#allocation5 + $0x270] sm:$0xff]
    %v131 = vld [vmem:[#allocation5 + $0x278] sm:$0xff]
    %v132 = vld [vmem:[#allocation5 + $0x280] sm:$0xff]
    %v133 = vld [vmem:[#allocation5 + $0x288] sm:$0xff]
    %v134 = vld [vmem:[#allocation5 + $0x290] sm:$0xff]
    %v135 = vld [vmem:[#allocation5 + $0x298] sm:$0xff]
    %v136 = vld [vmem:[#allocation5 + $0x2a0] sm:$0xff]
    %v137 = vld [vmem:[#allocation5 + $0x2a8] sm:$0xff]
    %v138 = vld [vmem:[#allocation5 + $0x2b0] sm:$0xff]
    %v139 = vld [vmem:[#allocation5 + $0x2b8] sm:$0xff]
    %v140 = vld [vmem:[#allocation5 + $0x2c0] sm:$0xff]
    %v141 = vld [vmem:[#allocation5 + $0x2c8] sm:$0xff]
    %v142 = vld [vmem:[#allocation5 + $0x2d0] sm:$0xff]
    %v143 = vld [vmem:[#allocation5 + $0x2d8] sm:$0xff]
    %v144 = vld [vmem:[#allocation5 + $0x2e0] sm:$0xff]
    %v145 = vld [vmem:[#allocation5 + $0x2e8] sm:$0xff]
    %v146 = vld [vmem:[#allocation5 + $0x2f0] sm:$0xff]
    %v147 = vld [vmem:[#allocation5 + $0x2f8] sm:$0xff]
    %v148 = vld [vmem:[#allocation5 + $0x300] sm:$0xff]
    %v149 = vld [vmem:[#allocation5 + $0x308] sm:$0xff]
    %v150 = vld [vmem:[#allocation5 + $0x310] sm:$0xff]
    %v151 = vld [vmem:[#allocation5 + $0x318] sm:$0xff]
    %v152 = vld [vmem:[#allocation5 + $0x320] sm:$0xff]
    %v153 = vld [vmem:[#allocation5 + $0x328] sm:$0xff]
    %v154 = vld [vmem:[#allocation5 + $0x330] sm:$0xff]
    %v155 = vld [vmem:[#allocation5 + $0x338] sm:$0xff]
    %v156 = vld [vmem:[#allocation5 + $0x340] sm:$0xff]
    %v157 = vld [vmem:[#allocation5 + $0x348] sm:$0xff]
    %v158 = vld [vmem:[#allocation5 + $0x350] sm:$0xff]
    %v159 = vld [vmem:[#allocation5 + $0x358] sm:$0xff]
    %v160 = vld [vmem:[#allocation5 + $0x360] sm:$0xff]
    %v161 = vld [vmem:[#allocation5 + $0x368] sm:$0xff]
    %v162 = vld [vmem:[#allocation5 + $0x370] sm:$0xff]
    %v163 = vld [vmem:[#allocation5 + $0x378] sm:$0xff]
    %v164 = vld [vmem:[#allocation5 + $0x380] sm:$0xff]
    %v165 = vld [vmem:[#allocation5 + $0x388] sm:$0xff]
    %v166 = vld [vmem:[#allocation5 + $0x390] sm:$0xff]
    %v167 = vld [vmem:[#allocation5 + $0x398] sm:$0xff]
    %v168 = vld [vmem:[#allocation5 + $0x3a0] sm:$0xff]
    %v169 = vld [vmem:[#allocation5 + $0x3a8] sm:$0xff]
    %v170 = vld [vmem:[#allocation5 + $0x3b0] sm:$0xff]
    %v171 = vld [vmem:[#allocation5 + $0x3b8] sm:$0xff]
    %v172 = vld [vmem:[#allocation5 + $0x3c0] sm:$0xff]
    %v173 = vld [vmem:[#allocation5 + $0x3c8] sm:$0xff]
    %v174 = vld [vmem:[#allocation5 + $0x3d0] sm:$0xff]
    %v175 = vld [vmem:[#allocation5 + $0x3d8] sm:$0xff]
    %v176 = vld [vmem:[#allocation5 + $0x3e0] sm:$0xff]
    %v177 = vld [vmem:[#allocation5 + $0x3e8] sm:$0xff]
    %v178 = vld [vmem:[#allocation5 + $0x3f0] sm:$0xff]
    %v179 = vld [vmem:[#allocation5 + $0x3f8] sm:$0xff]
    %v180 = vld [vmem:[#allocation5 + $0x400] sm:$0xff]
    %v181 = vld [vmem:[#allocation5 + $0x408] sm:$0xff]
    %v182 = vld [vmem:[#allocation5 + $0x410] sm:$0xff]
    %v183 = vld [vmem:[#allocation5 + $0x418] sm:$0xff]
    %v184 = vld [vmem:[#allocation5 + $0x420] sm:$0xff]
    %v185 = vld [vmem:[#allocation5 + $0x428] sm:$0xff]
    %v186 = vld [vmem:[#allocation5 + $0x430] sm:$0xff]
    %v187 = vld [vmem:[#allocation5 + $0x438] sm:$0xff]
    %v188 = vld [vmem:[#allocation5 + $0x440] sm:$0xff]
    %v189 = vld [vmem:[#allocation5 + $0x448] sm:$0xff]
    %v190 = vld [vmem:[#allocation5 + $0x450] sm:$0xff]
    %v191 = vld [vmem:[#allocation5 + $0x458] sm:$0xff]
    %v192 = vld [vmem:[#allocation5 + $0x460] sm:$0xff]
    %v193 = vld [vmem:[#allocation5 + $0x468] sm:$0xff]
    %v194 = vld [vmem:[#allocation5 + $0x470] sm:$0xff]
    %v195 = vld [vmem:[#allocation5 + $0x478] sm:$0xff]
    %v196 = vld [vmem:[#allocation5 + $0x480] sm:$0xff]
    %v197 = vld [vmem:[#allocation5 + $0x488] sm:$0xff]
    %v198 = vld [vmem:[#allocation5 + $0x490] sm:$0xff]
    %v199 = vld [vmem:[#allocation5 + $0x498] sm:$0xff]
    %v200 = vld [vmem:[#allocation5 + $0x4a0] sm:$0xff]
    %v201 = vld [vmem:[#allocation5 + $0x4a8] sm:$0xff]
    %v202 = vld [vmem:[#allocation5 + $0x4b0] sm:$0xff]
    %v203 = vld [vmem:[#allocation5 + $0x4b8] sm:$0xff]
    %v204 = vld [vmem:[#allocation5 + $0x4c0] sm:$0xff]
    %v205 = vld [vmem:[#allocation5 + $0x4c8] sm:$0xff]
    %v206 = vld [vmem:[#allocation5 + $0x4d0] sm:$0xff]
    %v207 = vld [vmem:[#allocation5 + $0x4d8] sm:$0xff]
    %v208 = vld [vmem:[#allocation5 + $0x4e0] sm:$0xff]
    %v209 = vld [vmem:[#allocation5 + $0x4e8] sm:$0xff]
    %v210 = vld [vmem:[#allocation5 + $0x4f0] sm:$0xff]
    %v211 = vld [vmem:[#allocation5 + $0x4f8] sm:$0xff]
    %v212 = vld [vmem:[#allocation5 + $0x500] sm:$0xff]
    %v213 = vld [vmem:[#allocation5 + $0x508] sm:$0xff]
    %v214 = vld [vmem:[#allocation5 + $0x510] sm:$0xff]
    %v215 = vld [vmem:[#allocation5 + $0x518] sm:$0xff]
    %v216 = vld [vmem:[#allocation5 + $0x520] sm:$0xff]
    %v217 = vld [vmem:[#allocation5 + $0x528] sm:$0xff]
    %v218 = vld [vmem:[#allocation5 + $0x530] sm:$0xff]
    %v219 = vld [vmem:[#allocation5 + $0x538] sm:$0xff]
    %v220 = vld [vmem:[#allocation5 + $0x540] sm:$0xff]
    %v221 = vld [vmem:[#allocation5 + $0x548] sm:$0xff]
    %v222 = vld [vmem:[#allocation5 + $0x550] sm:$0xff]
    %v223 = vld [vmem:[#allocation5 + $0x558] sm:$0xff]
    %v224 = vld [vmem:[#allocation5 + $0x560] sm:$0xff]
    %v225 = vld [vmem:[#allocation5 + $0x568] sm:$0xff]
    %v226 = vld [vmem:[#allocation5 + $0x570] sm:$0xff]
    %v227 = vld [vmem:[#allocation5 + $0x578] sm:$0xff]
    %v228 = vld [vmem:[#allocation5 + $0x580] sm:$0xff]
    %v229 = vld [vmem:[#allocation5 + $0x588] sm:$0xff]
    %v230 = vld [vmem:[#allocation5 + $0x590] sm:$0xff]
    %v231 = vld [vmem:[#allocation5 + $0x598] sm:$0xff]
    %v232 = vld [vmem:[#allocation5 + $0x5a0] sm:$0xff]
    %v233 = vld [vmem:[#allocation5 + $0x5a8] sm:$0xff]
    %v234 = vld [vmem:[#allocation5 + $0x5b0] sm:$0xff]
    %v235 = vld [vmem:[#allocation5 + $0x5b8] sm:$0xff]
    %v236 = vld [vmem:[#allocation5 + $0x5c0] sm:$0xff]
    %v237 = vld [vmem:[#allocation5 + $0x5c8] sm:$0xff]
    %v238 = vld [vmem:[#allocation5 + $0x5d0] sm:$0xff]
    %v239 = vld [vmem:[#allocation5 + $0x5d8] sm:$0xff]
    %v240 = vld [vmem:[#allocation5 + $0x5e0] sm:$0xff]
    %v241 = vld [vmem:[#allocation5 + $0x5e8] sm:$0xff]
    %v242 = vld [vmem:[#allocation5 + $0x5f0] sm:$0xff]
    %v243 = vld [vmem:[#allocation5 + $0x5f8] sm:$0xff]
    %244 = vmatprep.subr.mxu0 %v98
    %245 = vmatpush1.msra.mxu0 %v97
    %246 = vmatprep.subr.mxu0 %v95
    %247 = vmatpush1.msra.mxu0 %v94
    %248 = vmatprep.subr.mxu0 %v92
    %249 = vmatpush1.msra.mxu0 %v91
    %250 = vmatprep.subr.mxu0 %v89
    %251 = vmatpush1.msra.mxu0 %v88
    %252 = vmatprep.subr.mxu0 %v86
    %253 = vmatpush1.msra.mxu0 %v85
    %254 = vmatprep.subr.mxu0 %v83
    %255 = vmatpush1.msra.mxu0 %v82
    %256 = vmatprep.subr.mxu0 %v80
    %257 = vmatpush1.msra.mxu0 %v79
    %258 = vmatprep.subr.mxu0 %v77
    %259 = vmatpush1.msra.mxu0 %v76
    %260 = vmatprep.subr.mxu0 %v74
    %261 = vmatpush1.msra.mxu0 %v73
    %262 = vmatprep.subr.mxu0 %v71
    %263 = vmatpush1.msra.mxu0 %v70
    %264 = vmatprep.subr.mxu0 %v68
    %265 = vmatpush1.msra.mxu0 %v67
    %266 = vmatprep.subr.mxu0 %v65
    %267 = vmatpush1.msra.mxu0 %v64
    %268 = vmatprep.subr.mxu0 %v62
    %269 = vmatpush1.msra.mxu0 %v61
    %270 = vmatprep.subr.mxu0 %v59
    %271 = vmatpush1.msra.mxu0 %v58
    %272 = vmatprep.subr.mxu0 %v56
    %273 = vmatpush1.msra.mxu0 %v55
    %274 = vmatprep.subr.mxu0 %v53
    %275 = vmatpush1.msra.mxu0 %v52
    %276 = vmatprep.subr.mxu0 %v146
    %277 = vmatpush2.msra.mxu0 %v145
    %278 = vmatprep.subr.mxu0 %v143
    %279 = vmatpush2.msra.mxu0 %v142
    %280 = vmatprep.subr.mxu0 %v140
    %281 = vmatpush2.msra.mxu0 %v139
    %282 = vmatprep.subr.mxu0 %v137
    %283 = vmatpush2.msra.mxu0 %v136
    %284 = vmatprep.subr.mxu0 %v134
    %285 = vmatpush2.msra.mxu0 %v133
    %286 = vmatprep.subr.mxu0 %v131
    %287 = vmatpush2.msra.mxu0 %v130
    %288 = vmatprep.subr.mxu0 %v128
    %289 = vmatpush2.msra.mxu0 %v127
    %290 = vmatprep.subr.mxu0 %v125
    %291 = vmatpush2.msra.mxu0 %v124
    %292 = vmatprep.subr.mxu0 %v122
    %293 = vmatpush2.msra.mxu0 %v121
    %294 = vmatprep.subr.mxu0 %v119
    %295 = vmatpush2.msra.mxu0 %v118
    %296 = vmatprep.subr.mxu0 %v116
    %297 = vmatpush2.msra.mxu0 %v115
    %298 = vmatprep.subr.mxu0 %v113
    %299 = vmatpush2.msra.mxu0 %v112
    %300 = vmatprep.subr.mxu0 %v110
    %301 = vmatpush2.msra.mxu0 %v109
    %302 = vmatprep.subr.mxu0 %v107
    %303 = vmatpush2.msra.mxu0 %v106
    %304 = vmatprep.subr.mxu0 %v104
    %305 = vmatpush2.msra.mxu0 %v103
    %306 = vmatprep.subr.mxu0 %v101
    %307 = vmatpush2.msra.mxu0 %v100
    %308 = vmatprep.mubr.f32.mxu0 %v41
    %309 = vmatmul.mubr.f32.gmra.mxu0 %v40
    %v310 = vpop.f32.mrf.mxu0
    %v311 = vadd.f32 0.0, %v310
    %v312 = vpop.f32.mrf.mxu0
    %v313 = vadd.f32 0.0, %v312
    %314 = vmatprep.mubr.f32.mxu0 %v45
    %315 = vmatmul.mubr.f32.gmra.mxu0 %v44
    %v316 = vpop.f32.mrf.mxu0
    %v317 = vadd.f32 0.0, %v316
    %v318 = vpop.f32.mrf.mxu0
    %v319 = vadd.f32 0.0, %v318
    %320 = vmatprep.mubr.f32.mxu0 %v49
    %321 = vmatmul.mubr.f32.gmra.mxu0 %v48
    %v322 = vpop.f32.mrf.mxu0
    %v323 = vadd.f32 0.0, %v322
    %v324 = vpop.f32.mrf.mxu0
    %v325 = vadd.f32 0.0, %v324
    %326 = vdwg.mxu0
    %327 = vmatprep.subr.mxu0 %v194
    %328 = vmatpush1.msra.mxu0 %v193
    %329 = vmatprep.subr.mxu0 %v191
    %330 = vmatpush1.msra.mxu0 %v190
    %331 = vmatprep.subr.mxu0 %v188
    %332 = vmatpush1.msra.mxu0 %v187
    %333 = vmatprep.subr.mxu0 %v185
    %334 = vmatpush1.msra.mxu0 %v184
    %335 = vmatprep.subr.mxu0 %v182
    %336 = vmatpush1.msra.mxu0 %v181
    %337 = vmatprep.subr.mxu0 %v179
    %338 = vmatpush1.msra.mxu0 %v178
    %339 = vmatprep.subr.mxu0 %v176
    %340 = vmatpush1.msra.mxu0 %v175
    %341 = vmatprep.subr.mxu0 %v173
    %342 = vmatpush1.msra.mxu0 %v172
    %343 = vmatprep.subr.mxu0 %v170
    %344 = vmatpush1.msra.mxu0 %v169
    %345 = vmatprep.subr.mxu0 %v167
    %346 = vmatpush1.msra.mxu0 %v166
    %347 = vmatprep.subr.mxu0 %v164
    %348 = vmatpush1.msra.mxu0 %v163
    %349 = vmatprep.subr.mxu0 %v161
    %350 = vmatpush1.msra.mxu0 %v160
    %351 = vmatprep.subr.mxu0 %v158
    %352 = vmatpush1.msra.mxu0 %v157
    %353 = vmatprep.subr.mxu0 %v155
    %354 = vmatpush1.msra.mxu0 %v154
    %355 = vmatprep.subr.mxu0 %v152
    %356 = vmatpush1.msra.mxu0 %v151
    %357 = vmatprep.subr.mxu0 %v149
    %358 = vmatpush1.msra.mxu0 %v148
    %359 = vmatprep.subr.mxu0 %v242
    %360 = vmatpush2.msra.mxu0 %v241
    %361 = vmatprep.subr.mxu0 %v239
    %362 = vmatpush2.msra.mxu0 %v238
    %363 = vmatprep.subr.mxu0 %v236
    %364 = vmatpush2.msra.mxu0 %v235
    %365 = vmatprep.subr.mxu0 %v233
    %366 = vmatpush2.msra.mxu0 %v232
    %367 = vmatprep.subr.mxu0 %v230
    %368 = vmatpush2.msra.mxu0 %v229
    %369 = vmatprep.subr.mxu0 %v227
    %370 = vmatpush2.msra.mxu0 %v226
    %371 = vmatprep.subr.mxu0 %v224
    %372 = vmatpush2.msra.mxu0 %v223
    %373 = vmatprep.subr.mxu0 %v221
    %374 = vmatpush2.msra.mxu0 %v220
    %375 = vmatprep.subr.mxu0 %v218
    %376 = vmatpush2.msra.mxu0 %v217
    %377 = vmatprep.subr.mxu0 %v215
    %378 = vmatpush2.msra.mxu0 %v214
    %379 = vmatprep.subr.mxu0 %v212
    %380 = vmatpush2.msra.mxu0 %v211
    %381 = vmatprep.subr.mxu0 %v209
    %382 = vmatpush2.msra.mxu0 %v208
    %383 = vmatprep.subr.mxu0 %v206
    %384 = vmatpush2.msra.mxu0 %v205
    %385 = vmatprep.subr.mxu0 %v203
    %386 = vmatpush2.msra.mxu0 %v202
    %387 = vmatprep.subr.mxu0 %v200
    %388 = vmatpush2.msra.mxu0 %v199
    %389 = vmatprep.subr.mxu0 %v197
    %390 = vmatpush2.msra.mxu0 %v196
    %391 = vmatprep.mubr.f32.mxu0 %v43
    %392 = vmatmul.mubr.f32.gmra.mxu0 %v42
    %v393 = vpop.f32.mrf.mxu0
    %v394 = vadd.f32 %v311, %v393
    %v395 = vpop.f32.mrf.mxu0
    %v396 = vadd.f32 %v313, %v395
    %397 = vmatprep.mubr.f32.mxu0 %v47
    %398 = vmatmul.mubr.f32.gmra.mxu0 %v46
    %v399 = vpop.f32.mrf.mxu0
    %v400 = vadd.f32 %v317, %v399
    %v401 = vpop.f32.mrf.mxu0
    %v402 = vadd.f32 %v319, %v401
    %403 = vmatprep.mubr.f32.mxu0 %v51
    %404 = vmatmul.mubr.f32.gmra.mxu0 %v50
    %v405 = vpop.f32.mrf.mxu0
    %v406 = vadd.f32 %v323, %v405
    %v407 = vpop.f32.mrf.mxu0
    %v408 = vadd.f32 %v325, %v407
    %409 = vdwg.mxu0
    %410 = vmatprep.subr.mxu0 0.0
    %411 = vmatpush1.msra.mxu0 %v99
    %412 = vmatprep.subr.mxu0 0.0
    %413 = vmatpush1.msra.mxu0 %v96
    %414 = vmatprep.subr.mxu0 0.0
    %415 = vmatpush1.msra.mxu0 %v93
    %416 = vmatprep.subr.mxu0 0.0
    %417 = vmatpush1.msra.mxu0 %v90
    %418 = vmatprep.subr.mxu0 0.0
    %419 = vmatpush1.msra.mxu0 %v87
    %420 = vmatprep.subr.mxu0 0.0
    %421 = vmatpush1.msra.mxu0 %v84
    %422 = vmatprep.subr.mxu0 0.0
    %423 = vmatpush1.msra.mxu0 %v81
    %424 = vmatprep.subr.mxu0 0.0
    %425 = vmatpush1.msra.mxu0 %v78
    %426 = vmatprep.subr.mxu0 0.0
    %427 = vmatpush1.msra.mxu0 %v75
    %428 = vmatprep.subr.mxu0 0.0
    %429 = vmatpush1.msra.mxu0 %v72
    %430 = vmatprep.subr.mxu0 0.0
    %431 = vmatpush1.msra.mxu0 %v69
    %432 = vmatprep.subr.mxu0 0.0
    %433 = vmatpush1.msra.mxu0 %v66
    %434 = vmatprep.subr.mxu0 0.0
    %435 = vmatpush1.msra.mxu0 %v63
    %436 = vmatprep.subr.mxu0 0.0
    %437 = vmatpush1.msra.mxu0 %v60
    %438 = vmatprep.subr.mxu0 0.0
    %439 = vmatpush1.msra.mxu0 %v57
    %440 = vmatprep.subr.mxu0 0.0
    %441 = vmatpush1.msra.mxu0 %v54
    %442 = vmatprep.subr.mxu0 0.0
    %443 = vmatpush2.msra.mxu0 %v147
    %444 = vmatprep.subr.mxu0 0.0
    %445 = vmatpush2.msra.mxu0 %v144
    %446 = vmatprep.subr.mxu0 0.0
    %447 = vmatpush2.msra.mxu0 %v141
    %448 = vmatprep.subr.mxu0 0.0
    %449 = vmatpush2.msra.mxu0 %v138
    %450 = vmatprep.subr.mxu0 0.0
    %451 = vmatpush2.msra.mxu0 %v135
    %452 = vmatprep.subr.mxu0 0.0
    %453 = vmatpush2.msra.mxu0 %v132
    %454 = vmatprep.subr.mxu0 0.0
    %455 = vmatpush2.msra.mxu0 %v129
    %456 = vmatprep.subr.mxu0 0.0
    %457 = vmatpush2.msra.mxu0 %v126
    %458 = vmatprep.subr.mxu0 0.0
    %459 = vmatpush2.msra.mxu0 %v123
    %460 = vmatprep.subr.mxu0 0.0
    %461 = vmatpush2.msra.mxu0 %v120
    %462 = vmatprep.subr.mxu0 0.0
    %463 = vmatpush2.msra.mxu0 %v117
    %464 = vmatprep.subr.mxu0 0.0
    %465 = vmatpush2.msra.mxu0 %v114
    %466 = vmatprep.subr.mxu0 0.0
    %467 = vmatpush2.msra.mxu0 %v111
    %468 = vmatprep.subr.mxu0 0.0
    %469 = vmatpush2.msra.mxu0 %v108
    %470 = vmatprep.subr.mxu0 0.0
    %471 = vmatpush2.msra.mxu0 %v105
    %472 = vmatprep.subr.mxu0 0.0
    %473 = vmatpush2.msra.mxu0 %v102
    %474 = vmatprep.mubr.f32.mxu0 %v41
    %475 = vmatmul.mubr.f32.gmra.mxu0 %v40
    %v476 = vpop.f32.mrf.mxu0
    %v477 = vadd.f32 0.0, %v476
    %v478 = vpop.f32.mrf.mxu0
    %479 = vmatprep.mubr.f32.mxu0 %v45
    %480 = vmatmul.mubr.f32.gmra.mxu0 %v44
    %v481 = vpop.f32.mrf.mxu0
    %v482 = vadd.f32 0.0, %v481
    %v483 = vpop.f32.mrf.mxu0
    %484 = vmatprep.mubr.f32.mxu0 %v49
    %485 = vmatmul.mubr.f32.gmra.mxu0 %v48
    %v486 = vpop.f32.mrf.mxu0
    %v487 = vadd.f32 0.0, %v486
    %v488 = vpop.f32.mrf.mxu0
    %489 = vdwg.mxu0
    %490 = vmatprep.subr.mxu0 0.0
    %491 = vmatpush1.msra.mxu0 %v195
    %492 = vmatprep.subr.mxu0 0.0
    %493 = vmatpush1.msra.mxu0 %v192
    %494 = vmatprep.subr.mxu0 0.0
    %495 = vmatpush1.msra.mxu0 %v189
    %496 = vmatprep.subr.mxu0 0.0
    %497 = vmatpush1.msra.mxu0 %v186
    %498 = vmatprep.subr.mxu0 0.0
    %499 = vmatpush1.msra.mxu0 %v183
    %500 = vmatprep.subr.mxu0 0.0
    %501 = vmatpush1.msra.mxu0 %v180
    %502 = vmatprep.subr.mxu0 0.0
    %503 = vmatpush1.msra.mxu0 %v177
    %504 = vmatprep.subr.mxu0 0.0
    %505 = vmatpush1.msra.mxu0 %v174
    %506 = vmatprep.subr.mxu0 0.0
    %507 = vmatpush1.msra.mxu0 %v171
    %508 = vmatprep.subr.mxu0 0.0
    %509 = vmatpush1.msra.mxu0 %v168
    %510 = vmatprep.subr.mxu0 0.0
    %511 = vmatpush1.msra.mxu0 %v165
    %512 = vmatprep.subr.mxu0 0.0
    %513 = vmatpush1.msra.mxu0 %v162
    %514 = vmatprep.subr.mxu0 0.0
    %515 = vmatpush1.msra.mxu0 %v159
    %516 = vmatprep.subr.mxu0 0.0
    %517 = vmatpush1.msra.mxu0 %v156
    %518 = vmatprep.subr.mxu0 0.0
    %519 = vmatpush1.msra.mxu0 %v153
    %520 = vmatprep.subr.mxu0 0.0
    %521 = vmatpush1.msra.mxu0 %v150
    %522 = vmatprep.subr.mxu0 0.0
    %523 = vmatpush2.msra.mxu0 %v243
    %524 = vmatprep.subr.mxu0 0.0
    %525 = vmatpush2.msra.mxu0 %v240
    %526 = vmatprep.subr.mxu0 0.0
    %527 = vmatpush2.msra.mxu0 %v237
    %528 = vmatprep.subr.mxu0 0.0
    %529 = vmatpush2.msra.mxu0 %v234
    %530 = vmatprep.subr.mxu0 0.0
    %531 = vmatpush2.msra.mxu0 %v231
    %532 = vmatprep.subr.mxu0 0.0
    %533 = vmatpush2.msra.mxu0 %v228
    %534 = vmatprep.subr.mxu0 0.0
    %535 = vmatpush2.msra.mxu0 %v225
    %536 = vmatprep.subr.mxu0 0.0
    %537 = vmatpush2.msra.mxu0 %v222
    %538 = vmatprep.subr.mxu0 0.0
    %539 = vmatpush2.msra.mxu0 %v219
    %540 = vmatprep.subr.mxu0 0.0
    %541 = vmatpush2.msra.mxu0 %v216
    %542 = vmatprep.subr.mxu0 0.0
    %543 = vmatpush2.msra.mxu0 %v213
    %544 = vmatprep.subr.mxu0 0.0
    %545 = vmatpush2.msra.mxu0 %v210
    %546 = vmatprep.subr.mxu0 0.0
    %547 = vmatpush2.msra.mxu0 %v207
    %548 = vmatprep.subr.mxu0 0.0
    %549 = vmatpush2.msra.mxu0 %v204
    %550 = vmatprep.subr.mxu0 0.0
    %551 = vmatpush2.msra.mxu0 %v201
    %552 = vmatprep.subr.mxu0 0.0
    %553 = vmatpush2.msra.mxu0 %v198
    %554 = vmatprep.mubr.f32.mxu0 %v43
    %555 = vmatmul.mubr.f32.gmra.mxu0 %v42
    %v556 = vpop.f32.mrf.mxu0
    %v557 = vadd.f32 %v477, %v556
    %v558 = vpop.f32.mrf.mxu0
    %559 = vmatprep.mubr.f32.mxu0 %v47
    %560 = vmatmul.mubr.f32.gmra.mxu0 %v46
    %v561 = vpop.f32.mrf.mxu0
    %v562 = vadd.f32 %v482, %v561
    %v563 = vpop.f32.mrf.mxu0
    %564 = vmatprep.mubr.f32.mxu0 %v51
    %565 = vmatmul.mubr.f32.gmra.mxu0 %v50
    %v566 = vpop.f32.mrf.mxu0
    %v567 = vadd.f32 %v487, %v566
    %v568 = vpop.f32.mrf.mxu0
    %569 = vdwg.mxu0
    %570 = vst [vmem:[#allocation7] sm:$0xff] %v394
    %571 = vst [vmem:[#allocation7 + $0x8] sm:$0xff] %v396
    %572 = vst [vmem:[#allocation7 + $0x10] sm:$0xff] %v557
    %573 = vst [vmem:[#allocation7 + $0x18] sm:$0xff] %v400
    %574 = vst [vmem:[#allocation7 + $0x20] sm:$0xff] %v402
    %575 = vst [vmem:[#allocation7 + $0x28] sm:$0xff] %v562
    %576 = vst [vmem:[#allocation7 + $0x30] sm:$0xff] %v406
    %577 = vst [vmem:[#allocation7 + $0x38] sm:$0xff] %v408
    %578 = vst [vmem:[#allocation7 + $0x40] sm:$0xff] %v567
    // Predicated region
    $region18: #{tpu_custom_call.1} parent=1 // pred_check
      _
    $region19: #{tpu_custom_call.1} parent=1 // pred_check_branch
      %580 = sbr.rel (0) target = $region21
    $region20: #{tpu_custom_call.1} parent=1 // pred_region
      %s582 = ssub.s32 1152, 1152
      %583 = vsyncadd [#allocation4], %s582
      %s584 = sshll.u32 [#allocation7], 4
      %s585 = int_to_ptr.vmem [resolvable:$true] %s584
      %590 = dma.vmem_to_hbm [thread:$0]  %s585, 1152, %s2, [#allocation4], 384, 384, 24
    $region21: #{tpu_custom_call.1} parent=1 // pred_fallthru
      _
    // Predicated region
    $region22: #{tpu_custom_call.1} parent=1 // pred_check
      _
    $region23: #{tpu_custom_call.1} parent=1 // pred_check_branch
      %592 = sbr.rel (0) target = $region25
    $region24: #{tpu_custom_call.1} parent=1 // pred_region
      %593 = dma.done [#allocation4], 1152
    $region25: #{tpu_custom_call.1} parent=1 // pred_fallthru
      _
    %594 = vsyncpa [#allocation3], 1
    %595 = vsyncpa [#allocation6], 1
    %596 = vsyncpa [#allocation4], 1

</llo_original>
